<compile_context>
chip_gen: v5e
topology: v5e:2x2
jax: 0.10.0
libtpu: 0.0.40
codegen_flags: <defaults>
</compile_context>

<pallas_src>
import functools

import jax
import jax.numpy as jnp
from jax.experimental import pallas as pl
from jax.experimental.pallas import tpu as pltpu

_LANE = 128
_SUB = 8                      # f32 sublanes per vreg tile (partial-sum granularity)
_ROW_ALIGN = 32               # lcm of f32(8)/bf16(16)/int8(32) sublane tiling
_MAX_BLOCK_ROWS = 1024        # 1024x128 f32 = 512 KiB/block; ~85% of HBM roofline
_VMEM_LIMIT_BYTES = 32 * 1024 * 1024


def _cdiv(a, b):
    return -(-a // b)


def _round_up(x, m):
    return ((x + m - 1) // m) * m


def _mask_bce_kernel(pred_ref, sup_ref, mask_ref, out_ref, *,
                     pos_weight, valid_rows, has_tail, binary_targets):
    # Inputs may arrive narrow (int8 / bf16); compute in f32 on the VPU.
    x = pred_ref[...].astype(jnp.float32)
    m = mask_ref[...].astype(jnp.float32)

    # Numerically stable softplus(-x) (PyTorch BCEWithLogitsLoss formulation).
    sp = jnp.maximum(-x, 0.0) + jnp.log1p(jnp.exp(-jnp.abs(x)))

    if binary_targets:
        # Integer targets are treated as {0,1} indicators: selects instead of
        # mul/add chains trim a few VALU ops (matters on single-TC v7x).
        y_on = sup_ref[...].astype(jnp.float32) != 0.0
        raw = jnp.where(y_on, 0.0, x) + jnp.where(y_on, pos_weight, 1.0) * sp
    else:
        # General (possibly soft) float targets: exact BCEWithLogitsLoss formula.
        y = sup_ref[...].astype(jnp.float32)
        raw = (1.0 - y) * x + (1.0 + (pos_weight - 1.0) * y) * sp

    br = x.shape[0]  # static block rows (multiple of _SUB)

    if has_tail:
        # cdiv grid: the last block reads rows past the array end (garbage).
        # Gate BOTH the mask and the loss term — garbage x/y may be NaN/Inf and
        # NaN * 0 = NaN, so multiplying by a zeroed mask is not enough.
        row_ids = jax.lax.broadcasted_iota(jnp.int32, (br, _LANE), 0)
        rem = valid_rows - pl.program_id(0) * br
        valid = row_ids < rem
        masked_loss = jnp.where(valid, raw * m, 0.0)
        m_eff = jnp.where(valid, m, 0.0)
    else:
        masked_loss = raw * m
        m_eff = m

    # Lane-dense (8,128) partial sums: pure VALU adds across whole sublane tiles
    # (no XLU cross-lane reduce, no serializing scalar accumulator).  Both
    # partials go into one fused (16,128) output block -> single writeback DMA.
    out_ref[:_SUB, :] = jnp.sum(masked_loss.reshape(br // _SUB, _SUB, _LANE), axis=0)
    out_ref[_SUB:, :] = jnp.sum(m_eff.reshape(br // _SUB, _SUB, _LANE), axis=0)


def mask_bce_loss(predictions, supervision, mask, pos_weight=5.0):
    """Pallas implementation of MaskBCELoss.forward.  Returns an f32 scalar.

    Contract: store `supervision` / `mask` narrow upstream (int8/uint8 for binary
    data) — they are upcast to f32 *inside* the kernel, saving HBM bandwidth.
    Float supervision (soft targets) and real-valued masks are also supported
    (general formula path).  Note: narrow dtypes are exact only for {0,1} values.
    """
    # Pallas TPU dislikes i1 VMEM refs; bool -> int8 (no-op bit pattern).
    def as_kernel_dtype(a):
        return a.astype(jnp.int8) if a.dtype == jnp.bool_ else a

    supervision = as_kernel_dtype(supervision)
    mask = as_kernel_dtype(mask)
    binary_targets = bool(jnp.issubdtype(supervision.dtype, jnp.integer))

    n = predictions.size
    rows_raw = _cdiv(n, _LANE)
    lane_pad = rows_raw * _LANE - n  # only for ragged 128-tails; padded mask = 0

    def prep(a):
        a = a.reshape(-1)
        if lane_pad:
            a = jnp.pad(a, (0, lane_pad))
        return a.reshape(rows_raw, _LANE)

    p2, s2, m2 = prep(predictions), prep(supervision), prep(mask)

    if rows_raw <= 2 * _ROW_ALIGN:
        # Tiny input: one block covering everything (rounded to a sublane group;
        # any garbage tail rows are handled by the in-kernel mask).
        block_rows = _round_up(rows_raw, _SUB)
    else:
        # >= 2 grid steps so v7x megacore can shard across both TensorCores,
        # capped at the roofline-optimal 1024-row block.  32-aligned offsets
        # keep int8/bf16 windows native-tile aligned.
        block_rows = min(_MAX_BLOCK_ROWS, _round_up(_cdiv(rows_raw, 2), _ROW_ALIGN))
    grid_len = _cdiv(rows_raw, block_rows)
    has_tail = (rows_raw % block_rows) != 0

    kernel = functools.partial(
        _mask_bce_kernel,
        pos_weight=float(pos_weight),
        valid_rows=rows_raw,          # static in JAX; no scalar-prefetch SMEM read needed
        has_tail=has_tail,
        binary_targets=binary_targets,
    )

    parts = pl.pallas_call(
        kernel,
        out_shape=jax.ShapeDtypeStruct((grid_len * 2 * _SUB, _LANE), jnp.float32),
        grid_spec=pltpu.PrefetchScalarGridSpec(
            num_scalar_prefetch=0,
            grid=(grid_len,),
            in_specs=[pl.BlockSpec((block_rows, _LANE), lambda i: (i, 0))] * 3,
            out_specs=pl.BlockSpec((2 * _SUB, _LANE), lambda i: (i, 0)),
        ),
        compiler_params=pltpu.CompilerParams(
            # No cross-step dependency -> parallel (lets v7x use both TCs).
            dimension_semantics=("parallel",),
            vmem_limit_bytes=_VMEM_LIMIT_BYTES,
        ),
    )(p2, s2, m2)

    parts = parts.reshape(grid_len, 2, _SUB, _LANE)
    loss_sum = jnp.sum(parts[:, 0])
    mask_sum = jnp.sum(parts[:, 1])
    return loss_sum / (mask_sum + 1e-9)


def _reference(predictions, supervision, mask, pos_weight=5.0):
    x = predictions.astype(jnp.float32)
    y = supervision.astype(jnp.float32)
    m = mask.astype(jnp.float32)
    sp = jnp.maximum(-x, 0.0) + jnp.log1p(jnp.exp(-jnp.abs(x)))
    loss = (1.0 - y) * x + (1.0 + (pos_weight - 1.0) * y) * sp
    return jnp.sum(loss * m) / (jnp.sum(m) + 1e-9)


if __name__ == "__main__":
    key = jax.random.PRNGKey(0)
    kp, ks, km = jax.random.split(key, 3)

    B, C, H, W = 2, 4, 16, 16  # NCHW, like the PyTorch usage
    predictions = jax.random.normal(kp, (B, C, H, W), dtype=jnp.float32) * 2.0
    # Binary supervision / mask stored int8 upstream: 8 -> 6 B/elem HBM traffic.
    supervision = (jax.random.uniform(ks, (B, C, H, W)) > 0.5).astype(jnp.int8)
    mask = (jax.random.uniform(km, (B, C, H, W)) > 0.3).astype(jnp.int8)

    out = jax.block_until_ready(mask_bce_loss(predictions, supervision, mask, 5.0))

    ref = _reference(predictions, supervision, mask, 5.0)
    assert jnp.allclose(out, ref, rtol=1e-4, atol=1e-5), (out, ref)

    print("KERNEL_OK")
</pallas_src>

<mosaic_0001>
module attributes {stable_mosaic.version = 11 : i64} {
  func.func @_mask_bce_kernel(%arg0: i32, %arg1: memref<16x128xf32, #tpu.memory_space<vmem>>, %arg2: memref<16x128xi8, #tpu.memory_space<vmem>>, %arg3: memref<16x128xi8, #tpu.memory_space<vmem>>, %arg4: memref<16x128xf32, #tpu.memory_space<vmem>>) attributes {dimension_semantics = [#tpu.dimension_semantics<parallel>], iteration_bounds = array<i64: 1>, scalar_prefetch = 0 : i64, scratch_operands = 0 : i64, tpu.core_type = #tpu.core_type<tc>, window_params = [{transform_indices = @transform_0, window_bounds = array<i64: 16, 128>}, {transform_indices = @transform_1, window_bounds = array<i64: 16, 128>}, {transform_indices = @transform_2, window_bounds = array<i64: 16, 128>}, {transform_indices = @transform_3, window_bounds = array<i64: 16, 128>}]} {
    %c0 = arith.constant 0 : index
    %c0_0 = arith.constant 0 : index
    %0 = vector.load %arg1[%c0, %c0_0] : memref<16x128xf32, #tpu.memory_space<vmem>>, vector<16x128xf32>
    %c0_1 = arith.constant 0 : index
    %c0_2 = arith.constant 0 : index
    %1 = vector.load %arg3[%c0_1, %c0_2] : memref<16x128xi8, #tpu.memory_space<vmem>>, vector<16x128xi8>
    %2 = arith.sitofp %1 : vector<16x128xi8> to vector<16x128xf32>
    %cst = arith.constant 0.000000e+00 : f32
    %3 = vector.broadcast %cst : f32 to vector<16x128xf32>
    %4 = arith.subf %3, %0 : vector<16x128xf32>
    %cst_3 = arith.constant 0.000000e+00 : f32
    %5 = vector.broadcast %cst_3 : f32 to vector<16x128xf32>
    %6 = arith.maximumf %4, %5 : vector<16x128xf32>
    %7 = math.absf %0 : vector<16x128xf32>
    %cst_4 = arith.constant 0.000000e+00 : f32
    %8 = vector.broadcast %cst_4 : f32 to vector<16x128xf32>
    %9 = arith.subf %8, %7 : vector<16x128xf32>
    %10 = math.exp %9 : vector<16x128xf32>
    %11 = math.log1p %10 : vector<16x128xf32>
    %12 = arith.addf %6, %11 : vector<16x128xf32>
    %c0_5 = arith.constant 0 : index
    %c0_6 = arith.constant 0 : index
    %13 = vector.load %arg2[%c0_5, %c0_6] : memref<16x128xi8, #tpu.memory_space<vmem>>, vector<16x128xi8>
    %14 = arith.sitofp %13 : vector<16x128xi8> to vector<16x128xf32>
    %cst_7 = arith.constant 0.000000e+00 : f32
    %15 = vector.broadcast %cst_7 : f32 to vector<16x128xf32>
    %16 = arith.cmpf one, %14, %15 : vector<16x128xf32>
    %cst_8 = arith.constant 0.000000e+00 : f32
    %17 = vector.broadcast %cst_8 : f32 to vector<16x128xf32>
    %18 = arith.select %16, %17, %0 : vector<16x128xi1>, vector<16x128xf32>
    %cst_9 = arith.constant 5.000000e+00 : f32
    %cst_10 = arith.constant 1.000000e+00 : f32
    %19 = vector.broadcast %cst_9 : f32 to vector<16x128xf32>
    %20 = vector.broadcast %cst_10 : f32 to vector<16x128xf32>
    %21 = arith.select %16, %19, %20 : vector<16x128xi1>, vector<16x128xf32>
    %22 = arith.mulf %21, %12 : vector<16x128xf32>
    %23 = arith.addf %18, %22 : vector<16x128xf32>
    %24 = arith.mulf %23, %2 : vector<16x128xf32>
    %25 = vector.shape_cast %24 : vector<16x128xf32> to vector<2x8x128xf32>
    %cst_11 = arith.constant dense<0.000000e+00> : vector<8x128xf32>
    %26 = vector.multi_reduction <add>, %25, %cst_11 [0] : vector<2x8x128xf32> to vector<8x128xf32>
    %c0_12 = arith.constant 0 : index
    %c0_13 = arith.constant 0 : index
    %27 = vector.load %arg4[%c0_12, %c0_13] : memref<16x128xf32, #tpu.memory_space<vmem>>, vector<8x128xf32>
    tpu.vector_store %arg4[%c0_12, %c0_13], %26 {strides = array<i32>} : memref<16x128xf32, #tpu.memory_space<vmem>>, vector<8x128xf32>,
    %28 = vector.shape_cast %2 : vector<16x128xf32> to vector<2x8x128xf32>
    %cst_14 = arith.constant dense<0.000000e+00> : vector<8x128xf32>
    %29 = vector.multi_reduction <add>, %28, %cst_14 [0] : vector<2x8x128xf32> to vector<8x128xf32>
    %c8 = arith.constant 8 : index
    %c0_15 = arith.constant 0 : index
    %30 = vector.load %arg4[%c8, %c0_15] : memref<16x128xf32, #tpu.memory_space<vmem>>, vector<8x128xf32>
    tpu.vector_store %arg4[%c8, %c0_15], %29 {strides = array<i32>} : memref<16x128xf32, #tpu.memory_space<vmem>>, vector<8x128xf32>,
    return
  }
  func.func @transform_0(%arg0: i32) -> (i32, i32) {
    %c0_i32 = arith.constant 0 : i32
    %c0_i32_0 = arith.constant 0 : i32
    return %arg0, %c0_i32 : i32, i32
  }
  func.func @transform_1(%arg0: i32) -> (i32, i32) {
    %c0_i32 = arith.constant 0 : i32
    %c0_i32_0 = arith.constant 0 : i32
    return %arg0, %c0_i32 : i32, i32
  }
  func.func @transform_2(%arg0: i32) -> (i32, i32) {
    %c0_i32 = arith.constant 0 : i32
    %c0_i32_0 = arith.constant 0 : i32
    return %arg0, %c0_i32 : i32, i32
  }
  func.func @transform_3(%arg0: i32) -> (i32, i32) {
    %c0_i32 = arith.constant 0 : i32
    %c0_i32_0 = arith.constant 0 : i32
    return %arg0, %c0_i32 : i32, i32
  }
}

</mosaic_0001>

<llo_original>
// kernel: tpu_custom_call.1
$region0: #{tpu_custom_call.1}
  #allocation0 [shape = 'u32[]', space=smem, size = 0x4, offset = 0x4, fixed_abs, tag = 'smem constant byte address 0x4 - core index']
  #allocation1 [shape = 'u32[72,128]{1,0:T(1,128)}', space=vmem, size = 0x9000, scoped, tag = 'internal scratch']
  %s0 = inlined_call_operand.hbm [shape: f32[16,128], index: 0, kind: input, shape index: {}]
  %s1 = inlined_call_operand.hbm [shape: s8[16,128], index: 1, kind: input, shape index: {}]
  %s2 = inlined_call_operand.hbm [shape: s8[16,128], index: 2, kind: input, shape index: {}]
  %s3 = inlined_call_operand.hbm [shape: f32[16,128], index: 3, kind: output, shape index: {}]
  %s4 = sld [smem:[#allocation0]]
  $region34: #{tpu_custom_call.1} parent=0
    _
  %s6 = ssub.s32 1, %s4
  %s7 = scalar_select 0, %s6, %s4
  $region1: #{tpu_custom_call.1} parent=0
    #allocation2 [shape = 'u8[8192]{0}', space=vmem, size = 0x2000, scoped, tag = 'input window, operand 0, single buffered']
    #allocation3 [shape = 's32[1]{0}', space=sflag, size = 0x4, scoped, tag = 'scoped memory for tpu_custom_call.1']
    #allocation4 [shape = 's32[1]{0}', space=sflag, size = 0x4, scoped, tag = 'scoped memory for tpu_custom_call.1']
    #allocation5 [shape = 'u8[2048]{0}', space=vmem, size = 0x800, scoped, tag = 'input window, operand 1, single buffered']
    #allocation6 [shape = 's32[1]{0}', space=sflag, size = 0x4, scoped, tag = 'scoped memory for tpu_custom_call.1']
    #allocation7 [shape = 'u8[2048]{0}', space=vmem, size = 0x800, scoped, tag = 'input window, operand 2, single buffered']
    #allocation8 [shape = 'u8[8192]{0}', space=vmem, size = 0x2000, scoped, tag = 'output window, operand 0, single buffered']
    %8 = vsyncpa [#allocation3], 0
    %9 = vsyncpa [#allocation6], 0
    %10 = vsyncpa [#allocation4], 0
    // Predicated region
    $region2: #{tpu_custom_call.1} parent=1 // pred_check
      _
    $region3: #{tpu_custom_call.1} parent=1 // pred_check_branch
      %12 = sbr.rel (0) target = $region5
    $region4: #{tpu_custom_call.1} parent=1 // pred_region
      %14 = vsyncadd [#allocation3], 0
      %s15 = sshll.u32 %s0, 4
      %s16 = int_to_ptr.hbm [resolvable:$true] %s15
      %s17 = sshll.u32 [#allocation2], 4
      %s18 = int_to_ptr.vmem [resolvable:$true] %s17
      %23 = dma.hbm_to_vmem [thread:$0]  %s16, 256, %s18, [#allocation3], 128, 128, 8
    $region5: #{tpu_custom_call.1} parent=1 // pred_fallthru
      _
    // Predicated region
    $region6: #{tpu_custom_call.1} parent=1 // pred_check
      _
    $region7: #{tpu_custom_call.1} parent=1 // pred_check_branch
      %25 = sbr.rel (0) target = $region9
    $region8: #{tpu_custom_call.1} parent=1 // pred_region
      %27 = vsyncadd [#allocation6], 0
      %s28 = sshll.u32 %s1, 4
      %s29 = int_to_ptr.hbm [resolvable:$true] %s28
      %s30 = sshll.u32 [#allocation5], 4
      %s31 = int_to_ptr.vmem [resolvable:$true] %s30
      %36 = dma.hbm_to_vmem [thread:$0]  %s29, 64, %s31, [#allocation6], 32, 32, 2
    $region9: #{tpu_custom_call.1} parent=1 // pred_fallthru
      _
    // Predicated region
    $region10: #{tpu_custom_call.1} parent=1 // pred_check
      _
    $region11: #{tpu_custom_call.1} parent=1 // pred_check_branch
      %38 = sbr.rel (0) target = $region13
    $region12: #{tpu_custom_call.1} parent=1 // pred_region
      %40 = vsyncadd [#allocation6], 0
      %s41 = sshll.u32 %s2, 4
      %s42 = int_to_ptr.hbm [resolvable:$true] %s41
      %s43 = sshll.u32 [#allocation7], 4
      %s44 = int_to_ptr.vmem [resolvable:$true] %s43
      %49 = dma.hbm_to_vmem [thread:$0]  %s42, 64, %s44, [#allocation6], 32, 32, 2
    $region13: #{tpu_custom_call.1} parent=1 // pred_fallthru
      _
    // Predicated region
    $region14: #{tpu_custom_call.1} parent=1 // pred_check
      _
    $region15: #{tpu_custom_call.1} parent=1 // pred_check_branch
      %51 = sbr.rel (0) target = $region17
    $region16: #{tpu_custom_call.1} parent=1 // pred_region
      %53 = dma.done [#allocation3], 256
    $region17: #{tpu_custom_call.1} parent=1 // pred_fallthru
      _
    // Predicated region
    $region18: #{tpu_custom_call.1} parent=1 // pred_check
      _
    $region19: #{tpu_custom_call.1} parent=1 // pred_check_branch
      %55 = sbr.rel (0) target = $region21
    $region20: #{tpu_custom_call.1} parent=1 // pred_region
      %57 = dma.done [#allocation6], 64
    $region21: #{tpu_custom_call.1} parent=1 // pred_fallthru
      _
    // Predicated region
    $region22: #{tpu_custom_call.1} parent=1 // pred_check
      _
    $region23: #{tpu_custom_call.1} parent=1 // pred_check_branch
      %59 = sbr.rel (0) target = $region25
    $region24: #{tpu_custom_call.1} parent=1 // pred_region
      %61 = dma.done [#allocation6], 64
    $region25: #{tpu_custom_call.1} parent=1 // pred_fallthru
      _
    %v62 = vld [vmem:[#allocation2] sm:$0xff]
    %v63 = vld [vmem:[#allocation2 + $0x8] sm:$0xff]
    %v64 = vld [vmem:[#allocation7] sm:$0x3]
    %v65 = vld [vmem:[#allocation7 + $0x2] sm:$0x3]
    %v66 = vunpack.c.0.s8 %v64
    %v67 = vunpack.c.0.s8 %v65
    %v68 = vcvt.s32.f32 %v66
    %v69 = vcvt.s32.f32 %v67
    %v70 = vsub.f32 0.0, %v62
    %v71 = vsub.f32 0.0, %v63
    %v72 = vmax.f32 %v70, 0.0
    %v73 = vmax.f32 %v71, 0.0
    %v74 = vand.u32 2147483647, %v62
    %v75 = vand.u32 2147483647, %v63
    %v76 = vsub.f32 0.0, %v74
    %v77 = vsub.f32 0.0, %v75
    %v78 = vmul.f32 %v76, 1.442695
    %v79 = vpow.pop %v78
    %v80 = vmul.f32 %v77, 1.442695
    %v81 = vpow.pop %v80
    %v82 = vadd.f32 %v79, 1.0
    %v83 = vlog2.pop %v82
    %v84 = vmul.f32 %v83, 0.6931472
    %v85 = vmul.f32 -0.5, %v79
    %v86 = vadd.f32 %v85, 1.0
    %v87 = vmul.f32 %v86, %v79
    %v88 = vand.u32 2147483647, %v79
    %vm89 = vcmp.lt.f32.partialorder %v88, 0.0004427343
    %v90 = vsel %vm89, %v87, %v84
    %v91 = vadd.f32 %v81, 1.0
    %v92 = vlog2.pop %v91
    %v93 = vmul.f32 %v92, 0.6931472
    %v94 = vmul.f32 -0.5, %v81
    %v95 = vadd.f32 %v94, 1.0
    %v96 = vmul.f32 %v95, %v81
    %v97 = vand.u32 2147483647, %v81
    %vm98 = vcmp.lt.f32.partialorder %v97, 0.0004427343
    %v99 = vsel %vm98, %v96, %v93
    %v100 = vadd.f32 %v72, %v90
    %v101 = vadd.f32 %v73, %v99
    %v102 = vld [vmem:[#allocation5] sm:$0x3]
    %v103 = vld [vmem:[#allocation5 + $0x2] sm:$0x3]
    %v104 = vunpack.c.0.s8 %v102
    %v105 = vunpack.c.0.s8 %v103
    %v106 = vcvt.s32.f32 %v104
    %v107 = vcvt.s32.f32 %v105
    %vm108 = vcmp.ne.f32.partialorder %v106, 0.0
    %vm109 = vcmp.ne.f32.partialorder %v107, 0.0
    %v110 = vsel %vm108, 0.0, %v62
    %v111 = vsel %vm109, 0.0, %v63
    %v112 = vsel %vm108, 5.0, 1.0
    %v113 = vsel %vm109, 5.0, 1.0
    %v114 = vmul.f32 %v112, %v100
    %v115 = vmul.f32 %v113, %v101
    %v116 = vadd.f32 %v110, %v114
    %v117 = vadd.f32 %v111, %v115
    %v118 = vmul.f32 %v116, %v68
    %v119 = vmul.f32 %v117, %v69
    %v120 = vadd.f32 %v118, %v119
    %121 = vst [vmem:[#allocation8] sm:$0xff] %v120
    %v122 = vadd.f32 %v68, %v69
    %123 = vst [vmem:[#allocation8 + $0x8] sm:$0xff] %v122
    // Predicated region
    $region26: #{tpu_custom_call.1} parent=1 // pred_check
      _
    $region27: #{tpu_custom_call.1} parent=1 // pred_check_branch
      %125 = sbr.rel (0) target = $region29
    $region28: #{tpu_custom_call.1} parent=1 // pred_region
      %127 = vsyncadd [#allocation4], 0
      %s128 = sshll.u32 [#allocation8], 4
      %s129 = int_to_ptr.vmem [resolvable:$true] %s128
      %s130 = sshll.u32 %s3, 4
      %s131 = int_to_ptr.hbm [resolvable:$true] %s130
      %136 = dma.vmem_to_hbm [thread:$0]  %s129, 256, %s131, [#allocation4], 128, 128, 8
    $region29: #{tpu_custom_call.1} parent=1 // pred_fallthru
      _
    // Predicated region
    $region30: #{tpu_custom_call.1} parent=1 // pred_check
      _
    $region31: #{tpu_custom_call.1} parent=1 // pred_check_branch
      %138 = sbr.rel (0) target = $region33
    $region32: #{tpu_custom_call.1} parent=1 // pred_region
      %140 = dma.done [#allocation4], 256
    $region33: #{tpu_custom_call.1} parent=1 // pred_fallthru
      _
    %141 = vsyncpa [#allocation3], 1
    %142 = vsyncpa [#allocation6], 1
    %143 = vsyncpa [#allocation4], 1

</llo_original>
